<compile_context>
chip_gen: v7x
topology: tpu7x:2x2x1
jax: 0.10.0
libtpu: 0.0.40
codegen_flags: <defaults>
</compile_context>

<pallas_src>
import jax
import jax.numpy as jnp
from jax.experimental import pallas as pl
from jax.experimental.pallas import tpu as pltpu

# --- module config (synthetic, deterministic) -------------------------------
NUM_LABELS = 10
NUM_LABEL = NUM_LABELS + 1  # "num_label" in the PyTorch module


def _round_up(x, m):
    return ((x + m - 1) // m) * m


def _default_n_shards():
    # 2 TensorCores per chip only on v7x; on single-core v5e/v6e the shard
    # axis is just a serial loop (extra masked store, worse tile clamping).
    try:
        kind = jax.devices()[0].device_kind.lower()
    except Exception:
        return 1
    return 2 if "v7" in kind else 1


def _make_kernel(n_valid, tile):
    """n_valid, tile are static Python ints closed over at trace time."""

    def kernel(logits_ref, label_ref, mask_ref, out_ref, acc_ref):
        i = pl.program_id(1)  # reduction axis within this shard

        @pl.when(i == 0)
        def _():
            acc_ref[...] = jnp.zeros_like(acc_ref)

        logits = logits_ref[...].astype(jnp.float32)   # (C, T) classes on sublanes
        labels = label_ref[...]                        # (1, T) int32
        mask = mask_ref[...].astype(jnp.float32)       # (1, T)

        # Global row index carried by each lane. Tail lanes (>= n_valid) and any
        # clamped duplicate trailing blocks are dropped via where-SELECT below,
        # so NaN/Inf produced from OOB garbage never reaches the accumulator.
        block = pl.program_id(0) * pl.num_programs(1) + i
        col = block * tile + jax.lax.broadcasted_iota(jnp.int32, (1, tile), 1)
        valid = col < n_valid                                                  # (1, T)

        # numerically-stable log-softmax cross entropy per column (= per row)
        m = jnp.max(logits, axis=0, keepdims=True)                             # (1, T)
        lse = m + jnp.log(jnp.sum(jnp.exp(logits - m), axis=0, keepdims=True)) # (1, T)
        cls = jax.lax.broadcasted_iota(jnp.int32, logits.shape, 0)             # (C, T)
        picked = jnp.sum(jnp.where(cls == labels, logits, 0.0),
                         axis=0, keepdims=True)                                # (1, T)
        ce = (lse - picked) * mask                                             # (1, T)

        # lane-wide partial sums; no per-step cross-lane reduce, no scalar RMW
        acc_ref[...] += jnp.where(valid, ce, 0.0)

        @pl.when(i == pl.num_programs(1) - 1)
        def _():
            out_ref[...] = jnp.sum(acc_ref[...], axis=-1, keepdims=True)[None]  # (1,1,1)

    return kernel


def span_loss(span_logits, span_label, span_mask, *, tile_max=32768,
              n_shards=None, logits_dtype=jnp.bfloat16, logits_class_major=False):
    """Masked mean cross-entropy.

    span_logits: (B, S, F, C)  (or (C, N...) if logits_class_major=True)
    span_label : (B, S, F) integer targets
    span_mask  : (B, S, S) with S == F (same flattened length as labels)
    logits_dtype: dtype of the logits HBM stream fed to the kernel (bf16 by
                  default; the in-kernel math is always f32). Pass None to keep
                  the input dtype exactly.
    """
    if n_shards is None:
        n_shards = _default_n_shards()

    C = span_logits.shape[0] if logits_class_major else span_logits.shape[-1]
    N = span_logits.size // C
    assert span_mask.size == N, "mask must flatten to the same length as labels"
    divisor = span_mask.size  # torch divides by span_mask.view(-1).size(0)

    # Lane-dense layout: class axis on sublanes, rows on lanes.
    if logits_class_major:
        logits_cn = span_logits.reshape(C, N)          # already class-major: no transpose pass
    else:
        # One layout-change pass over the logits; the (optional) bf16 downcast is
        # fused into the same pass by XLA, so it costs no extra HBM traffic.
        # In a real model, produce the logits class-major upstream to skip it.
        logits_cn = jnp.transpose(span_logits.reshape(N, C))
    if logits_dtype is not None and logits_cn.dtype != logits_dtype:
        logits_cn = logits_cn.astype(logits_dtype)
    labels_1n = span_label.reshape(1, N).astype(jnp.int32)   # no-op if already int32
    mask_1n = span_mask.reshape(1, N)                         # native dtype, upcast in-kernel

    # Tile selection: as large as possible (amortize ~0.35us/step overhead) but
    # keep >= ~4 steps per shard so the DMA pipeline keeps depth; multiple of 128.
    tile = max(128, min(tile_max, _round_up(max(pl.cdiv(N, n_shards * 4), 1), 128)))
    num_blocks = pl.cdiv(N, tile)
    steps = pl.cdiv(num_blocks, n_shards)

    if n_shards * steps == num_blocks:
        col_map = lambda s, i: (0, s * steps + i)
    else:
        # Clamp trailing duplicate blocks so no DMA ever starts past the array;
        # their contribution is zeroed by the in-kernel validity mask.
        last = num_blocks - 1
        col_map = lambda s, i: (0, jnp.minimum(s * steps + i, last))

    if n_shards > 1:
        # Guaranteed 2-TensorCore split on v7x (plain "parallel" is incidental).
        dim_sem = (getattr(pltpu, "CORE_PARALLEL", "parallel"),
                   getattr(pltpu, "ARBITRARY", "arbitrary"))
    else:
        dim_sem = ("arbitrary", "arbitrary")

    partials = pl.pallas_call(
        _make_kernel(N, tile),
        out_shape=jax.ShapeDtypeStruct((n_shards, 1, 1), jnp.float32),
        grid_spec=pltpu.PrefetchScalarGridSpec(
            num_scalar_prefetch=0,
            grid=(n_shards, steps),
            in_specs=[
                pl.BlockSpec((C, tile), col_map),   # logits  (C, tile)
                pl.BlockSpec((1, tile), col_map),   # labels  (1, tile)
                pl.BlockSpec((1, tile), col_map),   # mask    (1, tile)
            ],
            out_specs=pl.BlockSpec((1, 1, 1), lambda s, i: (s, 0, 0)),
            scratch_shapes=[pltpu.VMEM((1, tile), jnp.float32)],
        ),
        compiler_params=pltpu.CompilerParams(dimension_semantics=dim_sem),
    )(logits_cn, labels_1n, mask_1n)

    # Sum the per-shard partials; mean over the ORIGINAL element count (matches torch).
    return jnp.sum(partials) / jnp.float32(divisor)


def span_loss_ref(span_logits, span_label, span_mask):
    C = span_logits.shape[-1]
    l = span_logits.reshape(-1, C).astype(jnp.float32)
    t = span_label.reshape(-1).astype(jnp.int32)
    m = span_mask.reshape(-1).astype(jnp.float32)
    lse = jax.scipy.special.logsumexp(l, axis=-1)
    picked = jnp.take_along_axis(l, t[:, None], axis=-1)[:, 0]
    ce = (lse - picked) * m
    return jnp.sum(ce) / m.shape[0]


if __name__ == "__main__":
    # small shapes: batch=2, max_seq_len=8, out_features=8, num_label=11
    B, S, F = 2, 8, 8
    key = jax.random.PRNGKey(0)
    k1, k2, k3 = jax.random.split(key, 3)
    span_logits = jax.random.normal(k1, (B, S, F, NUM_LABEL), dtype=jnp.float32)
    span_label = jax.random.randint(k2, (B, S, F), 0, NUM_LABEL, dtype=jnp.int32)
    span_mask = jax.random.bernoulli(k3, 0.7, (B, S, S)).astype(jnp.float32)

    ref = jax.block_until_ready(span_loss_ref(span_logits, span_label, span_mask))

    # Exact path (input dtype preserved end to end): tight f32 tolerance.
    exact = jax.block_until_ready(
        span_loss(span_logits, span_label, span_mask, logits_dtype=None))
    assert jnp.allclose(exact, ref, rtol=1e-5, atol=1e-5), (exact, ref)

    # Default fast path (bf16 logits HBM stream, f32 in-kernel math): bf16-level tolerance.
    fast = jax.block_until_ready(span_loss(span_logits, span_label, span_mask))
    assert jnp.allclose(fast, ref, rtol=1e-2, atol=1e-2), (fast, ref)

    print("KERNEL_OK")
</pallas_src>

<mosaic_0001>
module attributes {stable_mosaic.version = 11 : i64} {
  func.func @kernel(%arg0: i32, %arg1: i32, %arg2: memref<11x128xf32, #tpu.memory_space<vmem>>, %arg3: memref<1x128xi32, #tpu.memory_space<vmem>>, %arg4: memref<1x128xf32, #tpu.memory_space<vmem>>, %arg5: memref<1x1x1xf32, #tpu.memory_space<vmem>>, %arg6: memref<1x128xf32, #tpu.memory_space<vmem>>) attributes {dimension_semantics = [#tpu.dimension_semantics<arbitrary>, #tpu.dimension_semantics<arbitrary>], iteration_bounds = array<i64: 1, 1>, scalar_prefetch = 0 : i64, scratch_operands = 1 : i64, tpu.core_type = #tpu.core_type<tc>, window_params = [{transform_indices = @transform_0, window_bounds = array<i64: 11, 128>}, {transform_indices = @transform_1, window_bounds = array<i64: 1, 128>}, {transform_indices = @transform_2, window_bounds = array<i64: 1, 128>}, {transform_indices = @transform_3, window_bounds = array<i64: 1, 1, 1>}]} {
    %c0_i32 = arith.constant 0 : i32
    %0 = arith.cmpi eq, %arg1, %c0_i32 : i32
    %1 = arith.extui %0 : i1 to i32
    %c0_i32_0 = arith.constant 0 : i32
    %2 = arith.cmpi ne, %1, %c0_i32_0 : i32
    scf.if %2 {
      %cst_17 = arith.constant 0.000000e+00 : f32
      %40 = vector.broadcast %cst_17 : f32 to vector<1x128xf32>
      %c0_18 = arith.constant 0 : index
      %c0_19 = arith.constant 0 : index
      %41 = vector.load %arg6[%c0_18, %c0_19] : memref<1x128xf32, #tpu.memory_space<vmem>>, vector<1x128xf32>
      tpu.vector_store %arg6[%c0_18, %c0_19], %40 {strides = array<i32>} : memref<1x128xf32, #tpu.memory_space<vmem>>, vector<1x128xf32>,
    } else {
    }
    %c0 = arith.constant 0 : index
    %c0_1 = arith.constant 0 : index
    %3 = vector.load %arg2[%c0, %c0_1] : memref<11x128xf32, #tpu.memory_space<vmem>>, vector<11x128xf32>
    %c0_2 = arith.constant 0 : index
    %c0_3 = arith.constant 0 : index
    %4 = vector.load %arg3[%c0_2, %c0_3] : memref<1x128xi32, #tpu.memory_space<vmem>>, vector<1x128xi32>
    %c0_4 = arith.constant 0 : index
    %c0_5 = arith.constant 0 : index
    %5 = vector.load %arg4[%c0_4, %c0_5] : memref<1x128xf32, #tpu.memory_space<vmem>>, vector<1x128xf32>
    %c1_i32 = arith.constant 1 : i32
    %6 = arith.muli %arg0, %c1_i32 : i32
    %7 = arith.addi %6, %arg1 : i32
    %c128_i32 = arith.constant 128 : i32
    %8 = arith.muli %7, %c128_i32 : i32
    %9 = tpu.iota {dimensions = array<i32: 1>} : vector<1x128xi32>
    %10 = vector.broadcast %8 : i32 to vector<1x128xi32>
    %11 = arith.addi %10, %9 : vector<1x128xi32>
    %c128_i32_6 = arith.constant 128 : i32
    %12 = vector.broadcast %c128_i32_6 : i32 to vector<1x128xi32>
    %13 = arith.cmpi slt, %11, %12 : vector<1x128xi32>
    %cst = arith.constant dense<0xFF800000> : vector<128xf32>
    %14 = vector.multi_reduction <maximumf>, %3, %cst [0] : vector<11x128xf32> to vector<128xf32>
    %15 = vector.shape_cast %14 : vector<128xf32> to vector<1x128xf32>
    %16 = vector.broadcast %15 : vector<1x128xf32> to vector<11x128xf32>
    %17 = arith.subf %3, %16 : vector<11x128xf32>
    %18 = math.exp %17 : vector<11x128xf32>
    %cst_7 = arith.constant dense<0.000000e+00> : vector<128xf32>
    %19 = vector.multi_reduction <add>, %18, %cst_7 [0] : vector<11x128xf32> to vector<128xf32>
    %20 = vector.shape_cast %19 : vector<128xf32> to vector<1x128xf32>
    %21 = math.log %20 : vector<1x128xf32>
    %22 = arith.addf %15, %21 : vector<1x128xf32>
    %23 = tpu.iota {dimensions = array<i32: 0>} : vector<11x128xi32>
    %24 = vector.broadcast %4 : vector<1x128xi32> to vector<11x128xi32>
    %25 = arith.cmpi eq, %23, %24 : vector<11x128xi32>
    %cst_8 = arith.constant 0.000000e+00 : f32
    %26 = vector.broadcast %cst_8 : f32 to vector<11x128xf32>
    %27 = arith.select %25, %3, %26 : vector<11x128xi1>, vector<11x128xf32>
    %cst_9 = arith.constant dense<0.000000e+00> : vector<128xf32>
    %28 = vector.multi_reduction <add>, %27, %cst_9 [0] : vector<11x128xf32> to vector<128xf32>
    %29 = vector.shape_cast %28 : vector<128xf32> to vector<1x128xf32>
    %30 = arith.subf %22, %29 : vector<1x128xf32>
    %31 = arith.mulf %30, %5 : vector<1x128xf32>
    %c0_10 = arith.constant 0 : index
    %c0_11 = arith.constant 0 : index
    %32 = vector.load %arg6[%c0_10, %c0_11] : memref<1x128xf32, #tpu.memory_space<vmem>>, vector<1x128xf32>
    %cst_12 = arith.constant 0.000000e+00 : f32
    %33 = vector.broadcast %cst_12 : f32 to vector<1x128xf32>
    %34 = arith.select %13, %31, %33 : vector<1x128xi1>, vector<1x128xf32>
    %35 = arith.addf %32, %34 : vector<1x128xf32>
    %c0_13 = arith.constant 0 : index
    %c0_14 = arith.constant 0 : index
    %36 = vector.load %arg6[%c0_13, %c0_14] : memref<1x128xf32, #tpu.memory_space<vmem>>, vector<1x128xf32>
    tpu.vector_store %arg6[%c0_13, %c0_14], %35 {strides = array<i32>} : memref<1x128xf32, #tpu.memory_space<vmem>>, vector<1x128xf32>,
    %c0_i32_15 = arith.constant 0 : i32
    %37 = arith.cmpi eq, %arg1, %c0_i32_15 : i32
    %38 = arith.extui %37 : i1 to i32
    %c0_i32_16 = arith.constant 0 : i32
    %39 = arith.cmpi ne, %38, %c0_i32_16 : i32
    scf.if %39 {
      %c0_17 = arith.constant 0 : index
      %c0_18 = arith.constant 0 : index
      %40 = vector.load %arg6[%c0_17, %c0_18] : memref<1x128xf32, #tpu.memory_space<vmem>>, vector<1x128xf32>
      %cst_19 = arith.constant dense<0.000000e+00> : vector<1xf32>
      %41 = vector.multi_reduction <add>, %40, %cst_19 [1] : vector<1x128xf32> to vector<1xf32>
      %42 = vector.shape_cast %41 : vector<1xf32> to vector<1x1xf32>
      %43 = vector.shape_cast %42 : vector<1x1xf32> to vector<1x1x1xf32>
      %c0_20 = arith.constant 0 : index
      %c0_21 = arith.constant 0 : index
      %c0_22 = arith.constant 0 : index
      %44 = vector.load %arg5[%c0_20, %c0_21, %c0_22] : memref<1x1x1xf32, #tpu.memory_space<vmem>>, vector<1x1x1xf32>
      tpu.vector_store %arg5[%c0_20, %c0_21, %c0_22], %43 {strides = array<i32>} : memref<1x1x1xf32, #tpu.memory_space<vmem>>, vector<1x1x1xf32>,
    } else {
    }
    return
  }
  func.func @transform_0(%arg0: i32, %arg1: i32) -> (i32, i32) {
    %c1_i32 = arith.constant 1 : i32
    %0 = arith.muli %arg0, %c1_i32 : i32
    %1 = arith.addi %0, %arg1 : i32
    %c0_i32 = arith.constant 0 : i32
    %c0_i32_0 = arith.constant 0 : i32
    return %c0_i32, %1 : i32, i32
  }
  func.func @transform_1(%arg0: i32, %arg1: i32) -> (i32, i32) {
    %c1_i32 = arith.constant 1 : i32
    %0 = arith.muli %arg0, %c1_i32 : i32
    %1 = arith.addi %0, %arg1 : i32
    %c0_i32 = arith.constant 0 : i32
    %c0_i32_0 = arith.constant 0 : i32
    return %c0_i32, %1 : i32, i32
  }
  func.func @transform_2(%arg0: i32, %arg1: i32) -> (i32, i32) {
    %c1_i32 = arith.constant 1 : i32
    %0 = arith.muli %arg0, %c1_i32 : i32
    %1 = arith.addi %0, %arg1 : i32
    %c0_i32 = arith.constant 0 : i32
    %c0_i32_0 = arith.constant 0 : i32
    return %c0_i32, %1 : i32, i32
  }
  func.func @transform_3(%arg0: i32, %arg1: i32) -> (i32, i32, i32) {
    %c0_i32 = arith.constant 0 : i32
    %c0_i32_0 = arith.constant 0 : i32
    %c0_i32_1 = arith.constant 0 : i32
    return %arg0, %c0_i32, %c0_i32_0 : i32, i32, i32
  }
}

</mosaic_0001>

<llo_original>
// kernel: tpu_custom_call.1
$region0: #{tpu_custom_call.1}
  #allocation0 [shape = 'u32[]', space=smem, size = 0x4, offset = 0x4, fixed_abs, tag = 'smem constant byte address 0x4 - core index']
  #allocation1 [shape = 'u32[144,128]{1,0:T(1,128)}', space=vmem, size = 0x12000, scoped, tag = 'internal scratch']
  #allocation2 [shape = 'f32[1,128]{1,0:T(1,128)}', space=vmem, size = 0x200, scoped, tag = 'scratch operand']
  %s0 = inlined_call_operand.hbm [shape: f32[11,128], index: 0, kind: input, shape index: {}]
  %s1 = inlined_call_operand.vmem [shape: s32[1,128], index: 1, kind: input, shape index: {}]
  %s2 = inlined_call_operand.vmem [shape: f32[1,128], index: 2, kind: input, shape index: {}]
  %s3 = inlined_call_operand.hbm [shape: f32[1,1,1], index: 3, kind: output, shape index: {}]
  %s4 = sld [smem:[#allocation0]]
  $region34: #{tpu_custom_call.1} parent=0
    _
  %s6 = ssub.s32 1, %s4
  %s7 = scalar_select 0, %s6, %s4
  $region1: #{tpu_custom_call.1} parent=0
    #allocation3 [shape = 'u8[8192]{0}', space=vmem, size = 0x2000, scoped, tag = 'input window, operand 0, single buffered']
    #allocation4 [shape = 's32[1]{0}', space=sflag, size = 0x4, scoped, tag = 'scoped memory for tpu_custom_call.1']
    #allocation5 [shape = 's32[1]{0}', space=sflag, size = 0x4, scoped, tag = 'scoped memory for tpu_custom_call.1']
    #allocation6 [shape = 'u8[512]{0}', space=vmem, size = 0x400, scoped, tag = 'output window, operand 0, single buffered']
    %8 = vsyncpa [#allocation4], 0
    %9 = vsyncpa [#allocation5], 0
    // Predicated region
    $region2: #{tpu_custom_call.1} parent=1 // pred_check
      _
    $region3: #{tpu_custom_call.1} parent=1 // pred_check_branch
      %11 = sbr.rel (0) target = $region5
    $region4: #{tpu_custom_call.1} parent=1 // pred_region
      %s12 = sadd.s32 0, 0
      %s14 = ssub.s32 256, 256
      %15 = vsyncadd [#allocation4], %s14
      %s16 = smul.addr %s12, 128
      %s17 = scalar_lea.hbm %s0, %s16
      %s18 = sshll.u32 [#allocation3], 4
      %s19 = int_to_ptr.vmem [resolvable:$true] %s18
      %24 = dma.hbm_to_vmem [thread:$0]  %s17, 256, %s19, [#allocation4], 128, 128, 8
    $region5: #{tpu_custom_call.1} parent=1 // pred_fallthru
      _
    // Predicated region
    $region6: #{tpu_custom_call.1} parent=1 // pred_check
      _
    $region7: #{tpu_custom_call.1} parent=1 // pred_check_branch
      %26 = sbr.rel (0) target = $region9
    $region8: #{tpu_custom_call.1} parent=1 // pred_region
      %s27 = sadd.s32 0, 0
      %p28 = scmp.lt.s32.totalorder %s27, 0
      %s29 = scalar_select %p28, %s27, 0
      %s30 = scalar_lea.vmem %s1, %s29
      %s31 = sadd.s32 0, 0
    $region9: #{tpu_custom_call.1} parent=1 // pred_fallthru
      _
    // Predicated region
    $region10: #{tpu_custom_call.1} parent=1 // pred_check
      _
    $region11: #{tpu_custom_call.1} parent=1 // pred_check_branch
      %33 = sbr.rel (0) target = $region13
    $region12: #{tpu_custom_call.1} parent=1 // pred_region
      %s34 = sadd.s32 0, 0
      %p35 = scmp.lt.s32.totalorder %s34, 0
      %s36 = scalar_select %p35, %s34, 0
      %s37 = scalar_lea.vmem %s2, %s36
      %s38 = sadd.s32 0, 0
    $region13: #{tpu_custom_call.1} parent=1 // pred_fallthru
      _
    // Predicated region
    $region14: #{tpu_custom_call.1} parent=1 // pred_check
      _
    $region15: #{tpu_custom_call.1} parent=1 // pred_check_branch
      %40 = sbr.rel (0) target = $region17
    $region16: #{tpu_custom_call.1} parent=1 // pred_region
      %41 = dma.done [#allocation4], 256
    $region17: #{tpu_custom_call.1} parent=1 // pred_fallthru
      _
    %s42 = sadd.s32 0, 0
    %p43 = scmp.lt.s32.totalorder %s42, 0
    %s44 = scalar_select %p43, %s42, 0
    %s45 = scalar_lea.vmem %s1, %s44
    %s46 = sadd.s32 0, 0
    %p47 = scmp.lt.s32.totalorder %s46, 0
    %s48 = scalar_select %p47, %s46, 0
    %s49 = scalar_lea.vmem %s2, %s48
    %s50 = sadd.s32 0, 0
    %s51 = sadd.s32 0, 0
    %p52 = scmp.lt.s32.totalorder %s51, 0
    %s53 = scalar_select %p52, %s51, 0
    %s54 = scalar_lea.vmem %s1, %s53
    %s55 = sadd.s32 0, 0
    %s56 = sadd.s32 0, 0
    %p57 = scmp.lt.s32.totalorder %s56, 0
    %s58 = scalar_select %p57, %s56, 0
    %s59 = scalar_lea.vmem %s2, %s58
    %s60 = sadd.s32 0, 0
    %p61 = scmp.eq.s32.totalorder 0, 0
    // Predicated region
    $region18: #{tpu_custom_call.1} parent=1 // pred_check
      %p62 = pneg %p61
    $region19: #{tpu_custom_call.1} parent=1 // pred_check_branch
      %64 = sbr.rel (%p62) target = $region21
    $region20: #{tpu_custom_call.1} parent=1 // pred_region
      %65 = vst [vmem:[#allocation2] sm:$0x1] 0.0
    $region21: #{tpu_custom_call.1} parent=1 // pred_fallthru
      _
    %v66 = vld [vmem:[#allocation3] sm:$0xff]
    %v67 = vld [vmem:[#allocation3 + $0x8] sm:$0x7]
    %v68 = vld [vmem:[%s54] sm:$0x1]
    %v69 = vld [vmem:[%s59] sm:$0x1]
    %s70 = sadd.s32 0, 0
    %s71 = smul.u32 %s70, 128
    %v72 = vlaneseq
    %v73 = vand.u32 %v72, 127
    %v74 = vstv %s71
    %v75 = vadd.s32 %v74, %v73
    %vm76 = vcmp.lt.s32.totalorder %v75, 128
    %vm77 = vcmask 1042432
    %v78 = vsel %vm77, %v67, -inf
    %v79 = vmax.f32 %v66, %v78
    %v80 = vrot.slane %v79, 4
    %v81 = vmax.f32 %v79, %v80
    %v82 = vrot.slane %v81, 2
    %v83 = vmax.f32 %v81, %v82
    %v84 = vrot.slane %v83, 1
    %v85 = vmax.f32 %v83, %v84
    %v86 = vsub.f32 %v66, %v85
    %v87 = vsub.f32 %v67, %v85
    %v88 = vmul.f32 %v86, 1.442695
    %v89 = vpow.pop %v88
    %v90 = vmul.f32 %v87, 1.442695
    %v91 = vpow.pop %v90
    %v92 = vsel %vm77, %v91, 0.0
    %v93 = vadd.f32 %v89, %v92
    %v94 = vrot.slane %v93, 4
    %v95 = vadd.f32 %v93, %v94
    %v96 = vrot.slane %v95, 2
    %v97 = vadd.f32 %v95, %v96
    %v98 = vrot.slane %v97, 1
    %v99 = vadd.f32 %v97, %v98
    %v100 = vlog2.pop %v99
    %v101 = vmul.f32 %v100, 0.6931472
    %v102 = vadd.f32 %v85, %v101
    %v103 = vlaneseq
    %v104 = vshrl.u32 %v103, 7
    %v105 = vadd.s32 %v104, 8
    %v106 = vlaneseq
    %v107 = vshrl.u32 %v106, 7
    %v108 = vsub.s32 0, %v107
    %v109 = vrot.slane %v68, %v108
    %vm110 = vcmp.eq.s32.totalorder %v104, %v109
    %vm111 = vcmp.eq.s32.totalorder %v105, %v109
    %v112 = vsel %vm110, %v66, 0.0
    %v113 = vsel %vm111, %v67, 0.0
    %v114 = vsel %vm77, %v113, 0.0
    %v115 = vadd.f32 %v112, %v114
    %v116 = vrot.slane %v115, 4
    %v117 = vadd.f32 %v115, %v116
    %v118 = vrot.slane %v117, 2
    %v119 = vadd.f32 %v117, %v118
    %v120 = vrot.slane %v119, 1
    %v121 = vadd.f32 %v119, %v120
    %v122 = vsub.f32 %v102, %v121
    %v123 = vmul.f32 %v122, %v69
    %v124 = vld [vmem:[#allocation2] sm:$0x1]
    %v125 = vsel %vm76, %v123, 0.0
    %v126 = vadd.f32 %v124, %v125
    %127 = vst [vmem:[#allocation2] sm:$0x1] %v126
    // Predicated region
    $region22: #{tpu_custom_call.1} parent=1 // pred_check
      %p128 = pneg %p61
    $region23: #{tpu_custom_call.1} parent=1 // pred_check_branch
      %130 = sbr.rel (%p128) target = $region25
    $region24: #{tpu_custom_call.1} parent=1 // pred_region
      %v131 = vld [vmem:[#allocation2] sm:$0x1]
      %vm132 = vcmask 1040384
      %v133 = vsel %vm132, %v131, 0.0
      %134 = vadd.xlane.f32.xlu0 %v133
      %v135 = vpop.xlane.xlu0 %134
      %vm136 = vcmask 0
      %137 = vst.msk [vmem:[#allocation6] sm:$0x1] %vm136, %v135
    $region25: #{tpu_custom_call.1} parent=1 // pred_fallthru
      _
    // Predicated region
    $region26: #{tpu_custom_call.1} parent=1 // pred_check
      _
    $region27: #{tpu_custom_call.1} parent=1 // pred_check_branch
      %139 = sbr.rel (0) target = $region29
    $region28: #{tpu_custom_call.1} parent=1 // pred_region
      %s141 = ssub.s32 16, 16
      %142 = vsyncadd [#allocation5], %s141
      %s144 = sshll.u32 [#allocation6], 4
      %s145 = int_to_ptr.vmem [resolvable:$true] %s144
      %147 = dma.vmem_to_hbm [thread:$0]  %s145, 16, %s3, [#allocation5]
    $region29: #{tpu_custom_call.1} parent=1 // pred_fallthru
      _
    // Predicated region
    $region30: #{tpu_custom_call.1} parent=1 // pred_check
      _
    $region31: #{tpu_custom_call.1} parent=1 // pred_check_branch
      %149 = sbr.rel (0) target = $region33
    $region32: #{tpu_custom_call.1} parent=1 // pred_region
      %150 = dma.done [#allocation5], 16
    $region33: #{tpu_custom_call.1} parent=1 // pred_fallthru
      _
    %151 = vsyncpa [#allocation4], 1
    %152 = vsyncpa [#allocation5], 1

</llo_original>
